<compile_context>
chip_gen: v5e
topology: v5e:2x2
jax: 0.10.0
libtpu: 0.0.40
codegen_flags: <defaults>
</compile_context>

<pallas_src>
import functools

import jax
import jax.numpy as jnp
from jax import lax
from jax.experimental import pallas as pl
from jax.experimental.pallas import tpu as pltpu


def _conv3x3_kernel(x_ref, w_ref, m_ref, o_ref, taps_ref, *, W):
    """One batch-block per grid step.

    x_ref:    (Bt, C_in, HW + 2*(W+1))  zero-padded flat input slabs
    w_ref:    (C_out, K_pad)            tap-major weights, K zero-padded
    m_ref:    (9*C_in, HW)              per-tap/channel validity mask (0/1)
    o_ref:    (Bt, C_out, HW)           output (lane-dense: HW in lanes)
    taps_ref: (K_pad, Bt*HW)            im2col scratch
    """
    Bt, C_in, _ = x_ref.shape
    HW = o_ref.shape[2]
    KC = m_ref.shape[0]                 # 9 * C_in
    K_pad = taps_ref.shape[0]
    P = W + 1                           # flat pad per side (covers |dy*W+dx|)

    # K-padding rows: weights there are zero, but uninitialized VMEM could hold
    # NaN/Inf, so zero them explicitly (tiny: (K_pad-KC) x Bt*HW).
    if K_pad > KC:
        taps_ref[KC:, :] = jnp.zeros(
            (K_pad - KC, taps_ref.shape[1]), taps_ref.dtype)

    # Assemble the tap-stacked (im2col) matrix.  For tap (dy, dx) the shifted
    # slab is a static slice of the pre-padded input; horizontal wrap-around /
    # vertical out-of-bounds are killed by the precomputed mask (no in-kernel
    # iota or broadcast_in_dim).
    for b in range(Bt):
        k = 0
        for dy in (-1, 0, 1):
            for dx in (-1, 0, 1):
                start = P + dy * W + dx
                taps_ref[k * C_in:(k + 1) * C_in, b * HW:(b + 1) * HW] = (
                    x_ref[b, :, start:start + HW]
                    * m_ref[k * C_in:(k + 1) * C_in, :])
                k += 1

    # Single fused MXU matmul over all 9 taps and all Bt images, f32 accumulate.
    res = jnp.dot(w_ref[...], taps_ref[...],
                  preferred_element_type=jnp.float32)      # (C_out, Bt*HW)
    for b in range(Bt):
        o_ref[b] = res[:, b * HW:(b + 1) * HW].astype(o_ref.dtype)


def overlap_patch_embed_pallas(x_nchw, w_oihw, *, batch_block=None):
    """x_nchw: (B, in_c, H, W); w_oihw: (embed_dim, in_c, 3, 3).

    Output dtype follows x_nchw.dtype (run bf16 to halve HBM traffic)."""
    B, C_in, H, W = x_nchw.shape
    C_out = w_oihw.shape[0]
    HW = H * W
    P = W + 1
    HWp = HW + 2 * P
    KC = 9 * C_in
    K_pad = ((KC + 7) // 8) * 8            # sublane-align the contraction dim

    dtype = x_nchw.dtype
    itemsize = jnp.dtype(dtype).itemsize

    # NCHW -> (B, C_in, H*W) is a free reshape; zero-pad the flat spatial axis
    # once here so the kernel needs no VMEM->VMEM pad copy or border zeroing.
    x_pad = jnp.pad(x_nchw.reshape(B, C_in, HW), ((0, 0), (0, 0), (P, P)))

    # (C_out, C_in, ky, kx) -> (C_out, ky, kx, C_in) -> (C_out, 9*C_in): column
    # index ((ky*3+kx)*C_in + ci) matches the kernel's tap order.  Pad K -> K_pad.
    w_mat = jnp.transpose(w_oihw, (0, 2, 3, 1)).reshape(C_out, KC).astype(dtype)
    w_mat = jnp.pad(w_mat, ((0, 0), (0, K_pad - KC)))

    # Per-tap validity mask, pre-expanded to (9*C_in, HW) (built once; avoids
    # the previous 6 broadcast_in_dim per step inside the unrolled tap loop).
    h_idx = jnp.arange(HW, dtype=jnp.int32) // W
    w_idx = jnp.arange(HW, dtype=jnp.int32) % W
    rows = []
    for dy in (-1, 0, 1):
        for dx in (-1, 0, 1):
            ok = ((h_idx + dy >= 0) & (h_idx + dy < H) &
                  (w_idx + dx >= 0) & (w_idx + dx < W))
            rows.append(jnp.broadcast_to(ok[None, :], (C_in, HW)))
    mask = jnp.concatenate(rows, axis=0).astype(dtype)             # (9*C_in, HW)

    # Batch blocking: more work per grid step (per-step overhead ~0.35us) while
    # keeping double-buffered in+out blocks comfortably inside VMEM (v5e's
    # default scoped limit is only 16 MiB).
    if batch_block is None:
        per_img = (C_in * HWp + C_out * HW) * itemsize
        budget = 8 << 20
        batch_block = max(1, min(B, budget // max(1, 2 * per_img)))
        while B % batch_block:
            batch_block -= 1
    Bt = batch_block
    assert B % Bt == 0, (B, Bt)
    grid = (B // Bt,)

    taps_bytes = K_pad * Bt * HW * itemsize
    block_bytes = 2 * (Bt * (C_in * HWp + C_out * HW)
                       + C_out * K_pad + KC * HW) * itemsize
    vmem_limit = int(min(max(2 * (block_bytes + taps_bytes), 16 << 20), 48 << 20))

    kernel = functools.partial(_conv3x3_kernel, W=W)
    out = pl.pallas_call(
        kernel,
        out_shape=jax.ShapeDtypeStruct((B, C_out, HW), dtype),
        grid_spec=pltpu.PrefetchScalarGridSpec(
            num_scalar_prefetch=0,
            grid=grid,
            in_specs=[
                pl.BlockSpec((Bt, C_in, HWp), lambda i: (i, 0, 0)),
                pl.BlockSpec((C_out, K_pad), lambda i: (0, 0)),    # constant
                pl.BlockSpec((KC, HW), lambda i: (0, 0)),          # constant
            ],
            out_specs=pl.BlockSpec((Bt, C_out, HW), lambda i: (i, 0, 0)),
            scratch_shapes=[pltpu.VMEM((K_pad, Bt * HW), dtype)],
        ),
        compiler_params=pltpu.CompilerParams(
            dimension_semantics=("parallel",),     # batch blocks independent
            vmem_limit_bytes=vmem_limit,
        ),
        cost_estimate=pl.CostEstimate(
            flops=2 * B * C_out * KC * HW,
            transcendentals=0,
            bytes_accessed=(B * C_in * HWp + C_out * K_pad + KC * HW
                            + B * C_out * HW) * itemsize,
        ),
    )(x_pad, w_mat, mask)

    # (B, C_out, H*W) -> (B, C_out, H, W): free reshape, already NCHW.
    return out.reshape(B, C_out, H, W)


# ---------------- pure-JAX reference (PyTorch NCHW semantics) ---------------

def overlap_patch_embed_ref(x, w):
    return lax.conv_general_dilated(
        x.astype(jnp.float32), w.astype(jnp.float32),
        window_strides=(1, 1), padding=[(1, 1), (1, 1)],
        dimension_numbers=('NCHW', 'OIHW', 'NCHW'),
        precision=lax.Precision.HIGHEST)


if __name__ == "__main__":
    key = jax.random.PRNGKey(0)
    kx, kw = jax.random.split(key)

    B, in_c, H, W = 2, 3, 16, 16
    embed_dim = 48

    x = jax.random.normal(kx, (B, in_c, H, W), jnp.float32)
    proj_w = jax.random.normal(kw, (embed_dim, in_c, 3, 3), jnp.float32) * 0.2

    # float32 I/O path (MXU default precision; structural bugs would give O(1) errors).
    out_f32 = jax.block_until_ready(overlap_patch_embed_pallas(x, proj_w))
    ref = overlap_patch_embed_ref(x, proj_w)
    assert out_f32.shape == (B, embed_dim, H, W), out_f32.shape
    err_f32 = float(jnp.max(jnp.abs(out_f32 - ref)))
    if err_f32 > 1e-2:
        raise AssertionError(f"f32 Pallas kernel mismatch, max abs err={err_f32}")

    # bf16 I/O path (halves HBM traffic; accumulation stays f32 in the MXU).
    x_bf, w_bf = x.astype(jnp.bfloat16), proj_w.astype(jnp.bfloat16)
    out_bf = jax.block_until_ready(overlap_patch_embed_pallas(x_bf, w_bf))
    assert out_bf.dtype == jnp.bfloat16 and out_bf.shape == (B, embed_dim, H, W)
    ref_bf = overlap_patch_embed_ref(x_bf, w_bf)
    err_bf = float(jnp.max(jnp.abs(out_bf.astype(jnp.float32) - ref_bf)))
    if err_bf > 5e-2:
        raise AssertionError(f"bf16 Pallas kernel mismatch, max abs err={err_bf}")

    print("KERNEL_OK")
</pallas_src>

<mosaic_0001>
module attributes {stable_mosaic.version = 11 : i64} {
  func.func @_conv3x3_kernel(%arg0: i32, %arg1: memref<2x3x290xf32, #tpu.memory_space<vmem>>, %arg2: memref<48x32xf32, #tpu.memory_space<vmem>>, %arg3: memref<27x256xf32, #tpu.memory_space<vmem>>, %arg4: memref<2x48x256xf32, #tpu.memory_space<vmem>>, %arg5: memref<32x512xf32, #tpu.memory_space<vmem>>) attributes {dimension_semantics = [#tpu.dimension_semantics<parallel>], iteration_bounds = array<i64: 1>, scalar_prefetch = 0 : i64, scratch_operands = 1 : i64, tpu.core_type = #tpu.core_type<tc>, window_params = [{transform_indices = @transform_0, window_bounds = array<i64: 2, 3, 290>}, {pipeline_mode = #tpu.pipeline_mode<synchronous>, transform_indices = @transform_1, window_bounds = array<i64: 48, 32>}, {pipeline_mode = #tpu.pipeline_mode<synchronous>, transform_indices = @transform_2, window_bounds = array<i64: 27, 256>}, {transform_indices = @transform_3, window_bounds = array<i64: 2, 48, 256>}]} {
    %cst = arith.constant 0.000000e+00 : f32
    %0 = vector.broadcast %cst : f32 to vector<5x512xf32>
    %c27 = arith.constant 27 : index
    %c0 = arith.constant 0 : index
    %1 = vector.load %arg5[%c27, %c0] : memref<32x512xf32, #tpu.memory_space<vmem>>, vector<5x512xf32>
    tpu.vector_store %arg5[%c27, %c0], %0 {strides = array<i32>} : memref<32x512xf32, #tpu.memory_space<vmem>>, vector<5x512xf32>,
    %c0_0 = arith.constant 0 : index
    %c0_1 = arith.constant 0 : index
    %c0_2 = arith.constant 0 : index
    %2 = vector.load %arg1[%c0_0, %c0_1, %c0_2] : memref<2x3x290xf32, #tpu.memory_space<vmem>>, vector<1x3x256xf32>
    %3 = vector.shape_cast %2 : vector<1x3x256xf32> to vector<3x256xf32>
    %c0_3 = arith.constant 0 : index
    %c0_4 = arith.constant 0 : index
    %4 = vector.load %arg3[%c0_3, %c0_4] : memref<27x256xf32, #tpu.memory_space<vmem>>, vector<3x256xf32>
    %5 = arith.mulf %3, %4 : vector<3x256xf32>
    %c0_5 = arith.constant 0 : index
    %c0_6 = arith.constant 0 : index
    %6 = vector.load %arg5[%c0_5, %c0_6] : memref<32x512xf32, #tpu.memory_space<vmem>>, vector<3x256xf32>
    tpu.vector_store %arg5[%c0_5, %c0_6], %5 {strides = array<i32>} : memref<32x512xf32, #tpu.memory_space<vmem>>, vector<3x256xf32>,
    %c0_7 = arith.constant 0 : index
    %c0_8 = arith.constant 0 : index
    %c1 = arith.constant 1 : index
    %7 = vector.load %arg1[%c0_7, %c0_8, %c1] : memref<2x3x290xf32, #tpu.memory_space<vmem>>, vector<1x3x256xf32>
    %8 = vector.shape_cast %7 : vector<1x3x256xf32> to vector<3x256xf32>
    %c3 = arith.constant 3 : index
    %c0_9 = arith.constant 0 : index
    %9 = vector.load %arg3[%c3, %c0_9] : memref<27x256xf32, #tpu.memory_space<vmem>>, vector<3x256xf32>
    %10 = arith.mulf %8, %9 : vector<3x256xf32>
    %c3_10 = arith.constant 3 : index
    %c0_11 = arith.constant 0 : index
    %11 = vector.load %arg5[%c3_10, %c0_11] : memref<32x512xf32, #tpu.memory_space<vmem>>, vector<3x256xf32>
    tpu.vector_store %arg5[%c3_10, %c0_11], %10 {strides = array<i32>} : memref<32x512xf32, #tpu.memory_space<vmem>>, vector<3x256xf32>,
    %c0_12 = arith.constant 0 : index
    %c0_13 = arith.constant 0 : index
    %c2 = arith.constant 2 : index
    %12 = vector.load %arg1[%c0_12, %c0_13, %c2] : memref<2x3x290xf32, #tpu.memory_space<vmem>>, vector<1x3x256xf32>
    %13 = vector.shape_cast %12 : vector<1x3x256xf32> to vector<3x256xf32>
    %c6 = arith.constant 6 : index
    %c0_14 = arith.constant 0 : index
    %14 = vector.load %arg3[%c6, %c0_14] : memref<27x256xf32, #tpu.memory_space<vmem>>, vector<3x256xf32>
    %15 = arith.mulf %13, %14 : vector<3x256xf32>
    %c6_15 = arith.constant 6 : index
    %c0_16 = arith.constant 0 : index
    %16 = vector.load %arg5[%c6_15, %c0_16] : memref<32x512xf32, #tpu.memory_space<vmem>>, vector<3x256xf32>
    tpu.vector_store %arg5[%c6_15, %c0_16], %15 {strides = array<i32>} : memref<32x512xf32, #tpu.memory_space<vmem>>, vector<3x256xf32>,
    %c0_17 = arith.constant 0 : index
    %c0_18 = arith.constant 0 : index
    %c16 = arith.constant 16 : index
    %17 = vector.load %arg1[%c0_17, %c0_18, %c16] : memref<2x3x290xf32, #tpu.memory_space<vmem>>, vector<1x3x256xf32>
    %18 = vector.shape_cast %17 : vector<1x3x256xf32> to vector<3x256xf32>
    %c9 = arith.constant 9 : index
    %c0_19 = arith.constant 0 : index
    %19 = vector.load %arg3[%c9, %c0_19] : memref<27x256xf32, #tpu.memory_space<vmem>>, vector<3x256xf32>
    %20 = arith.mulf %18, %19 : vector<3x256xf32>
    %c9_20 = arith.constant 9 : index
    %c0_21 = arith.constant 0 : index
    %21 = vector.load %arg5[%c9_20, %c0_21] : memref<32x512xf32, #tpu.memory_space<vmem>>, vector<3x256xf32>
    tpu.vector_store %arg5[%c9_20, %c0_21], %20 {strides = array<i32>} : memref<32x512xf32, #tpu.memory_space<vmem>>, vector<3x256xf32>,
    %c0_22 = arith.constant 0 : index
    %c0_23 = arith.constant 0 : index
    %c17 = arith.constant 17 : index
    %22 = vector.load %arg1[%c0_22, %c0_23, %c17] : memref<2x3x290xf32, #tpu.memory_space<vmem>>, vector<1x3x256xf32>
    %23 = vector.shape_cast %22 : vector<1x3x256xf32> to vector<3x256xf32>
    %c12 = arith.constant 12 : index
    %c0_24 = arith.constant 0 : index
    %24 = vector.load %arg3[%c12, %c0_24] : memref<27x256xf32, #tpu.memory_space<vmem>>, vector<3x256xf32>
    %25 = arith.mulf %23, %24 : vector<3x256xf32>
    %c12_25 = arith.constant 12 : index
    %c0_26 = arith.constant 0 : index
    %26 = vector.load %arg5[%c12_25, %c0_26] : memref<32x512xf32, #tpu.memory_space<vmem>>, vector<3x256xf32>
    tpu.vector_store %arg5[%c12_25, %c0_26], %25 {strides = array<i32>} : memref<32x512xf32, #tpu.memory_space<vmem>>, vector<3x256xf32>,
    %c0_27 = arith.constant 0 : index
    %c0_28 = arith.constant 0 : index
    %c18 = arith.constant 18 : index
    %27 = vector.load %arg1[%c0_27, %c0_28, %c18] : memref<2x3x290xf32, #tpu.memory_space<vmem>>, vector<1x3x256xf32>
    %28 = vector.shape_cast %27 : vector<1x3x256xf32> to vector<3x256xf32>
    %c15 = arith.constant 15 : index
    %c0_29 = arith.constant 0 : index
    %29 = vector.load %arg3[%c15, %c0_29] : memref<27x256xf32, #tpu.memory_space<vmem>>, vector<3x256xf32>
    %30 = arith.mulf %28, %29 : vector<3x256xf32>
    %c15_30 = arith.constant 15 : index
    %c0_31 = arith.constant 0 : index
    %31 = vector.load %arg5[%c15_30, %c0_31] : memref<32x512xf32, #tpu.memory_space<vmem>>, vector<3x256xf32>
    tpu.vector_store %arg5[%c15_30, %c0_31], %30 {strides = array<i32>} : memref<32x512xf32, #tpu.memory_space<vmem>>, vector<3x256xf32>,
    %c0_32 = arith.constant 0 : index
    %c0_33 = arith.constant 0 : index
    %c32 = arith.constant 32 : index
    %32 = vector.load %arg1[%c0_32, %c0_33, %c32] : memref<2x3x290xf32, #tpu.memory_space<vmem>>, vector<1x3x256xf32>
    %33 = vector.shape_cast %32 : vector<1x3x256xf32> to vector<3x256xf32>
    %c18_34 = arith.constant 18 : index
    %c0_35 = arith.constant 0 : index
    %34 = vector.load %arg3[%c18_34, %c0_35] : memref<27x256xf32, #tpu.memory_space<vmem>>, vector<3x256xf32>
    %35 = arith.mulf %33, %34 : vector<3x256xf32>
    %c18_36 = arith.constant 18 : index
    %c0_37 = arith.constant 0 : index
    %36 = vector.load %arg5[%c18_36, %c0_37] : memref<32x512xf32, #tpu.memory_space<vmem>>, vector<3x256xf32>
    tpu.vector_store %arg5[%c18_36, %c0_37], %35 {strides = array<i32>} : memref<32x512xf32, #tpu.memory_space<vmem>>, vector<3x256xf32>,
    %c0_38 = arith.constant 0 : index
    %c0_39 = arith.constant 0 : index
    %c33 = arith.constant 33 : index
    %37 = vector.load %arg1[%c0_38, %c0_39, %c33] : memref<2x3x290xf32, #tpu.memory_space<vmem>>, vector<1x3x256xf32>
    %38 = vector.shape_cast %37 : vector<1x3x256xf32> to vector<3x256xf32>
    %c21 = arith.constant 21 : index
    %c0_40 = arith.constant 0 : index
    %39 = vector.load %arg3[%c21, %c0_40] : memref<27x256xf32, #tpu.memory_space<vmem>>, vector<3x256xf32>
    %40 = arith.mulf %38, %39 : vector<3x256xf32>
    %c21_41 = arith.constant 21 : index
    %c0_42 = arith.constant 0 : index
    %41 = vector.load %arg5[%c21_41, %c0_42] : memref<32x512xf32, #tpu.memory_space<vmem>>, vector<3x256xf32>
    tpu.vector_store %arg5[%c21_41, %c0_42], %40 {strides = array<i32>} : memref<32x512xf32, #tpu.memory_space<vmem>>, vector<3x256xf32>,
    %c0_43 = arith.constant 0 : index
    %c0_44 = arith.constant 0 : index
    %c34 = arith.constant 34 : index
    %42 = vector.load %arg1[%c0_43, %c0_44, %c34] : memref<2x3x290xf32, #tpu.memory_space<vmem>>, vector<1x3x256xf32>
    %43 = vector.shape_cast %42 : vector<1x3x256xf32> to vector<3x256xf32>
    %c24 = arith.constant 24 : index
    %c0_45 = arith.constant 0 : index
    %44 = vector.load %arg3[%c24, %c0_45] : memref<27x256xf32, #tpu.memory_space<vmem>>, vector<3x256xf32>
    %45 = arith.mulf %43, %44 : vector<3x256xf32>
    %c24_46 = arith.constant 24 : index
    %c0_47 = arith.constant 0 : index
    %46 = vector.load %arg5[%c24_46, %c0_47] : memref<32x512xf32, #tpu.memory_space<vmem>>, vector<3x256xf32>
    tpu.vector_store %arg5[%c24_46, %c0_47], %45 {strides = array<i32>} : memref<32x512xf32, #tpu.memory_space<vmem>>, vector<3x256xf32>,
    %c1_48 = arith.constant 1 : index
    %c0_49 = arith.constant 0 : index
    %c0_50 = arith.constant 0 : index
    %47 = vector.load %arg1[%c1_48, %c0_49, %c0_50] : memref<2x3x290xf32, #tpu.memory_space<vmem>>, vector<1x3x256xf32>
    %48 = vector.shape_cast %47 : vector<1x3x256xf32> to vector<3x256xf32>
    %c0_51 = arith.constant 0 : index
    %c0_52 = arith.constant 0 : index
    %49 = vector.load %arg3[%c0_51, %c0_52] : memref<27x256xf32, #tpu.memory_space<vmem>>, vector<3x256xf32>
    %50 = arith.mulf %48, %49 : vector<3x256xf32>
    %c0_53 = arith.constant 0 : index
    %c256 = arith.constant 256 : index
    %51 = vector.load %arg5[%c0_53, %c256] : memref<32x512xf32, #tpu.memory_space<vmem>>, vector<3x256xf32>
    tpu.vector_store %arg5[%c0_53, %c256], %50 {strides = array<i32>} : memref<32x512xf32, #tpu.memory_space<vmem>>, vector<3x256xf32>,
    %c1_54 = arith.constant 1 : index
    %c0_55 = arith.constant 0 : index
    %c1_56 = arith.constant 1 : index
    %52 = vector.load %arg1[%c1_54, %c0_55, %c1_56] : memref<2x3x290xf32, #tpu.memory_space<vmem>>, vector<1x3x256xf32>
    %53 = vector.shape_cast %52 : vector<1x3x256xf32> to vector<3x256xf32>
    %c3_57 = arith.constant 3 : index
    %c0_58 = arith.constant 0 : index
    %54 = vector.load %arg3[%c3_57, %c0_58] : memref<27x256xf32, #tpu.memory_space<vmem>>, vector<3x256xf32>
    %55 = arith.mulf %53, %54 : vector<3x256xf32>
    %c3_59 = arith.constant 3 : index
    %c256_60 = arith.constant 256 : index
    %56 = vector.load %arg5[%c3_59, %c256_60] : memref<32x512xf32, #tpu.memory_space<vmem>>, vector<3x256xf32>
    tpu.vector_store %arg5[%c3_59, %c256_60], %55 {strides = array<i32>} : memref<32x512xf32, #tpu.memory_space<vmem>>, vector<3x256xf32>,
    %c1_61 = arith.constant 1 : index
    %c0_62 = arith.constant 0 : index
    %c2_63 = arith.constant 2 : index
    %57 = vector.load %arg1[%c1_61, %c0_62, %c2_63] : memref<2x3x290xf32, #tpu.memory_space<vmem>>, vector<1x3x256xf32>
    %58 = vector.shape_cast %57 : vector<1x3x256xf32> to vector<3x256xf32>
    %c6_64 = arith.constant 6 : index
    %c0_65 = arith.constant 0 : index
    %59 = vector.load %arg3[%c6_64, %c0_65] : memref<27x256xf32, #tpu.memory_space<vmem>>, vector<3x256xf32>
    %60 = arith.mulf %58, %59 : vector<3x256xf32>
    %c6_66 = arith.constant 6 : index
    %c256_67 = arith.constant 256 : index
    %61 = vector.load %arg5[%c6_66, %c256_67] : memref<32x512xf32, #tpu.memory_space<vmem>>, vector<3x256xf32>
    tpu.vector_store %arg5[%c6_66, %c256_67], %60 {strides = array<i32>} : memref<32x512xf32, #tpu.memory_space<vmem>>, vector<3x256xf32>,
    %c1_68 = arith.constant 1 : index
    %c0_69 = arith.constant 0 : index
    %c16_70 = arith.constant 16 : index
    %62 = vector.load %arg1[%c1_68, %c0_69, %c16_70] : memref<2x3x290xf32, #tpu.memory_space<vmem>>, vector<1x3x256xf32>
    %63 = vector.shape_cast %62 : vector<1x3x256xf32> to vector<3x256xf32>
    %c9_71 = arith.constant 9 : index
    %c0_72 = arith.constant 0 : index
    %64 = vector.load %arg3[%c9_71, %c0_72] : memref<27x256xf32, #tpu.memory_space<vmem>>, vector<3x256xf32>
    %65 = arith.mulf %63, %64 : vector<3x256xf32>
    %c9_73 = arith.constant 9 : index
    %c256_74 = arith.constant 256 : index
    %66 = vector.load %arg5[%c9_73, %c256_74] : memref<32x512xf32, #tpu.memory_space<vmem>>, vector<3x256xf32>
    tpu.vector_store %arg5[%c9_73, %c256_74], %65 {strides = array<i32>} : memref<32x512xf32, #tpu.memory_space<vmem>>, vector<3x256xf32>,
    %c1_75 = arith.constant 1 : index
    %c0_76 = arith.constant 0 : index
    %c17_77 = arith.constant 17 : index
    %67 = vector.load %arg1[%c1_75, %c0_76, %c17_77] : memref<2x3x290xf32, #tpu.memory_space<vmem>>, vector<1x3x256xf32>
    %68 = vector.shape_cast %67 : vector<1x3x256xf32> to vector<3x256xf32>
    %c12_78 = arith.constant 12 : index
    %c0_79 = arith.constant 0 : index
    %69 = vector.load %arg3[%c12_78, %c0_79] : memref<27x256xf32, #tpu.memory_space<vmem>>, vector<3x256xf32>
    %70 = arith.mulf %68, %69 : vector<3x256xf32>
    %c12_80 = arith.constant 12 : index
    %c256_81 = arith.constant 256 : index
    %71 = vector.load %arg5[%c12_80, %c256_81] : memref<32x512xf32, #tpu.memory_space<vmem>>, vector<3x256xf32>
    tpu.vector_store %arg5[%c12_80, %c256_81], %70 {strides = array<i32>} : memref<32x512xf32, #tpu.memory_space<vmem>>, vector<3x256xf32>,
    %c1_82 = arith.constant 1 : index
    %c0_83 = arith.constant 0 : index
    %c18_84 = arith.constant 18 : index
    %72 = vector.load %arg1[%c1_82, %c0_83, %c18_84] : memref<2x3x290xf32, #tpu.memory_space<vmem>>, vector<1x3x256xf32>
    %73 = vector.shape_cast %72 : vector<1x3x256xf32> to vector<3x256xf32>
    %c15_85 = arith.constant 15 : index
    %c0_86 = arith.constant 0 : index
    %74 = vector.load %arg3[%c15_85, %c0_86] : memref<27x256xf32, #tpu.memory_space<vmem>>, vector<3x256xf32>
    %75 = arith.mulf %73, %74 : vector<3x256xf32>
    %c15_87 = arith.constant 15 : index
    %c256_88 = arith.constant 256 : index
    %76 = vector.load %arg5[%c15_87, %c256_88] : memref<32x512xf32, #tpu.memory_space<vmem>>, vector<3x256xf32>
    tpu.vector_store %arg5[%c15_87, %c256_88], %75 {strides = array<i32>} : memref<32x512xf32, #tpu.memory_space<vmem>>, vector<3x256xf32>,
    %c1_89 = arith.constant 1 : index
    %c0_90 = arith.constant 0 : index
    %c32_91 = arith.constant 32 : index
    %77 = vector.load %arg1[%c1_89, %c0_90, %c32_91] : memref<2x3x290xf32, #tpu.memory_space<vmem>>, vector<1x3x256xf32>
    %78 = vector.shape_cast %77 : vector<1x3x256xf32> to vector<3x256xf32>
    %c18_92 = arith.constant 18 : index
    %c0_93 = arith.constant 0 : index
    %79 = vector.load %arg3[%c18_92, %c0_93] : memref<27x256xf32, #tpu.memory_space<vmem>>, vector<3x256xf32>
    %80 = arith.mulf %78, %79 : vector<3x256xf32>
    %c18_94 = arith.constant 18 : index
    %c256_95 = arith.constant 256 : index
    %81 = vector.load %arg5[%c18_94, %c256_95] : memref<32x512xf32, #tpu.memory_space<vmem>>, vector<3x256xf32>
    tpu.vector_store %arg5[%c18_94, %c256_95], %80 {strides = array<i32>} : memref<32x512xf32, #tpu.memory_space<vmem>>, vector<3x256xf32>,
    %c1_96 = arith.constant 1 : index
    %c0_97 = arith.constant 0 : index
    %c33_98 = arith.constant 33 : index
    %82 = vector.load %arg1[%c1_96, %c0_97, %c33_98] : memref<2x3x290xf32, #tpu.memory_space<vmem>>, vector<1x3x256xf32>
    %83 = vector.shape_cast %82 : vector<1x3x256xf32> to vector<3x256xf32>
    %c21_99 = arith.constant 21 : index
    %c0_100 = arith.constant 0 : index
    %84 = vector.load %arg3[%c21_99, %c0_100] : memref<27x256xf32, #tpu.memory_space<vmem>>, vector<3x256xf32>
    %85 = arith.mulf %83, %84 : vector<3x256xf32>
    %c21_101 = arith.constant 21 : index
    %c256_102 = arith.constant 256 : index
    %86 = vector.load %arg5[%c21_101, %c256_102] : memref<32x512xf32, #tpu.memory_space<vmem>>, vector<3x256xf32>
    tpu.vector_store %arg5[%c21_101, %c256_102], %85 {strides = array<i32>} : memref<32x512xf32, #tpu.memory_space<vmem>>, vector<3x256xf32>,
    %c1_103 = arith.constant 1 : index
    %c0_104 = arith.constant 0 : index
    %c34_105 = arith.constant 34 : index
    %87 = vector.load %arg1[%c1_103, %c0_104, %c34_105] : memref<2x3x290xf32, #tpu.memory_space<vmem>>, vector<1x3x256xf32>
    %88 = vector.shape_cast %87 : vector<1x3x256xf32> to vector<3x256xf32>
    %c24_106 = arith.constant 24 : index
    %c0_107 = arith.constant 0 : index
    %89 = vector.load %arg3[%c24_106, %c0_107] : memref<27x256xf32, #tpu.memory_space<vmem>>, vector<3x256xf32>
    %90 = arith.mulf %88, %89 : vector<3x256xf32>
    %c24_108 = arith.constant 24 : index
    %c256_109 = arith.constant 256 : index
    %91 = vector.load %arg5[%c24_108, %c256_109] : memref<32x512xf32, #tpu.memory_space<vmem>>, vector<3x256xf32>
    tpu.vector_store %arg5[%c24_108, %c256_109], %90 {strides = array<i32>} : memref<32x512xf32, #tpu.memory_space<vmem>>, vector<3x256xf32>,
    %c0_110 = arith.constant 0 : index
    %c0_111 = arith.constant 0 : index
    %92 = vector.load %arg2[%c0_110, %c0_111] : memref<48x32xf32, #tpu.memory_space<vmem>>, vector<48x32xf32>
    %c0_112 = arith.constant 0 : index
    %c0_113 = arith.constant 0 : index
    %93 = vector.load %arg5[%c0_112, %c0_113] : memref<32x512xf32, #tpu.memory_space<vmem>>, vector<32x512xf32>
    %cst_114 = arith.constant dense<0.000000e+00> : vector<48x512xf32>
    %94 = tpu.matmul %92, %93, %cst_114 {dimension_numbers = #tpu.dot_dimension_numbers<[1], [0], [0], [1], [0, 0, 1, 1], [], []>} : vector<48x32xf32>, vector<32x512xf32>, vector<48x512xf32> -> vector<48x512xf32>
    %95 = vector.extract_strided_slice %94 {offsets = [0, 0], sizes = [48, 256], strides = [1, 1]} : vector<48x512xf32> to vector<48x256xf32>
    %c0_115 = arith.constant 0 : index
    %c0_116 = arith.constant 0 : index
    %c0_117 = arith.constant 0 : index
    %96 = vector.load %arg4[%c0_115, %c0_116, %c0_117] : memref<2x48x256xf32, #tpu.memory_space<vmem>>, vector<1x48x256xf32>
    %97 = vector.shape_cast %96 : vector<1x48x256xf32> to vector<48x256xf32>
    %98 = vector.shape_cast %95 : vector<48x256xf32> to vector<1x48x256xf32>
    tpu.vector_store %arg4[%c0_115, %c0_116, %c0_117], %98 {strides = array<i32>} : memref<2x48x256xf32, #tpu.memory_space<vmem>>, vector<1x48x256xf32>,
    %99 = vector.extract_strided_slice %94 {offsets = [0, 256], sizes = [48, 256], strides = [1, 1]} : vector<48x512xf32> to vector<48x256xf32>
    %c1_118 = arith.constant 1 : index
    %c0_119 = arith.constant 0 : index
    %c0_120 = arith.constant 0 : index
    %100 = vector.load %arg4[%c1_118, %c0_119, %c0_120] : memref<2x48x256xf32, #tpu.memory_space<vmem>>, vector<1x48x256xf32>
    %101 = vector.shape_cast %100 : vector<1x48x256xf32> to vector<48x256xf32>
    %102 = vector.shape_cast %99 : vector<48x256xf32> to vector<1x48x256xf32>
    tpu.vector_store %arg4[%c1_118, %c0_119, %c0_120], %102 {strides = array<i32>} : memref<2x48x256xf32, #tpu.memory_space<vmem>>, vector<1x48x256xf32>,
    return
  }
  func.func @transform_0(%arg0: i32) -> (i32, i32, i32) {
    %c0_i32 = arith.constant 0 : i32
    %c0_i32_0 = arith.constant 0 : i32
    %c0_i32_1 = arith.constant 0 : i32
    return %arg0, %c0_i32, %c0_i32_0 : i32, i32, i32
  }
  func.func @transform_1(%arg0: i32) -> (i32, i32) {
    %c0_i32 = arith.constant 0 : i32
    %c0_i32_0 = arith.constant 0 : i32
    %c0_i32_1 = arith.constant 0 : i32
    return %c0_i32, %c0_i32_0 : i32, i32
  }
  func.func @transform_2(%arg0: i32) -> (i32, i32) {
    %c0_i32 = arith.constant 0 : i32
    %c0_i32_0 = arith.constant 0 : i32
    %c0_i32_1 = arith.constant 0 : i32
    return %c0_i32, %c0_i32_0 : i32, i32
  }
  func.func @transform_3(%arg0: i32) -> (i32, i32, i32) {
    %c0_i32 = arith.constant 0 : i32
    %c0_i32_0 = arith.constant 0 : i32
    %c0_i32_1 = arith.constant 0 : i32
    return %arg0, %c0_i32, %c0_i32_0 : i32, i32, i32
  }
}

</mosaic_0001>

<llo_original>
// kernel: tpu_custom_call.1
$region0: #{tpu_custom_call.1}
  #allocation0 [shape = 'u32[]', space=smem, size = 0x4, offset = 0x4, fixed_abs, tag = 'smem constant byte address 0x4 - core index']
  #allocation1 [shape = 'u32[72,128]{1,0:T(1,128)}', space=vmem, size = 0x9000, scoped, tag = 'internal scratch']
  #allocation2 [shape = 'f32[32,512]{1,0:T(8,128)}', space=vmem, size = 0x10000, scoped, tag = 'scratch operand']
  %s0 = inlined_call_operand.vmem [shape: f32[2,3,290], index: 0, kind: input, shape index: {}]
  %s1 = inlined_call_operand.vmem [shape: f32[48,32], index: 1, kind: input, shape index: {}]
  %s2 = inlined_call_operand.vmem [shape: f32[27,256], index: 2, kind: input, shape index: {}]
  %s3 = inlined_call_operand.hbm [shape: f32[2,48,256], index: 3, kind: output, shape index: {}]
  %s4 = sld [smem:[#allocation0]]
  $region22: #{tpu_custom_call.1} parent=0
    _
  %s6 = ssub.s32 1, %s4
  %s7 = scalar_select 0, %s6, %s4
  $region1: #{tpu_custom_call.1} parent=0
    #allocation3 [shape = 'u8[98304]{0}', space=vmem, size = 0x18000, scoped, tag = 'output window, operand 0, single buffered']
    #allocation4 [shape = 's32[1]{0}', space=sflag, size = 0x4, scoped, tag = 'scoped memory for tpu_custom_call.1']
    %8 = vsyncpa [#allocation4], 0
    // Predicated region
    $region2: #{tpu_custom_call.1} parent=1 // pred_check
      _
    $region3: #{tpu_custom_call.1} parent=1 // pred_check_branch
      %10 = sbr.rel (0) target = $region5
    $region4: #{tpu_custom_call.1} parent=1 // pred_region
      _
    $region5: #{tpu_custom_call.1} parent=1 // pred_fallthru
      _
    // Predicated region
    $region6: #{tpu_custom_call.1} parent=1 // pred_check
      _
    $region7: #{tpu_custom_call.1} parent=1 // pred_check_branch
      %12 = sbr.rel (0) target = $region9
    $region8: #{tpu_custom_call.1} parent=1 // pred_region
      _
    $region9: #{tpu_custom_call.1} parent=1 // pred_fallthru
      _
    // Predicated region
    $region10: #{tpu_custom_call.1} parent=1 // pred_check
      _
    $region11: #{tpu_custom_call.1} parent=1 // pred_check_branch
      %14 = sbr.rel (0) target = $region13
    $region12: #{tpu_custom_call.1} parent=1 // pred_region
      _
    $region13: #{tpu_custom_call.1} parent=1 // pred_fallthru
      _
    %15 = vst [vmem:[#allocation2 + $0x60] sm:$0xf8] 0.0
    %16 = vst [vmem:[#allocation2 + $0x68] sm:$0xf8] 0.0
    %17 = vst [vmem:[#allocation2 + $0x70] sm:$0xf8] 0.0
    %18 = vst [vmem:[#allocation2 + $0x78] sm:$0xf8] 0.0
    %v19 = vld [vmem:[%s0] sm:$0x77]
    %v20 = vld [vmem:[%s2] sm:$0x7]
    %v21 = vld [vmem:[%s2 + $0x8] sm:$0x7]
    %v24 = vrot.slane %v21, 4
    %vm25 = vcmask 1043456
    %v26 = vsel %vm25, %v20, %v24
    %v28 = vmul.f32 %v19, %v26
    %30 = vst [vmem:[#allocation1] ss:$2 sm:$0xff] %v28
    %v31 = vld.sshfl [vmem:[#allocation1] sm:$0xff pattern:$0x75316420]
    %v32 = vld.sshfl [vmem:[#allocation1 + $0x8] sm:$0xff pattern:$0x75316420]
    %35 = vst [vmem:[#allocation2] sm:$0x7] %v31
    %36 = vst [vmem:[#allocation2 + $0x8] sm:$0x7] %v32
    %v37 = vld [vmem:[%s0] sm:$0x77]
    %v38 = vld [vmem:[%s0 + $0x8] sm:$0x7]
    %v39 = vld [vmem:[%s2] sm:$0x38]
    %v40 = vld [vmem:[%s2 + $0x8] sm:$0x38]
    %v43 = vrot.slane %v40, 4
    %v44 = vsel %vm25, %v39, %v43
    %v45 = vsel %vm25, %v43, %v39
    %v46 = vrot.slane %v45, 4
    %vm47 = vcmask 1040384
    %vm48 = vcmask 1044484
    %vm49 = vmor %vm47, %vm48
    %v50 = vrot.slane %v44, 7
    %v51 = vrot.slane %v50, 4
    %v52 = vrot.slane %v46, 7
    %v53 = vsel %vm49, %v51, %v52
    %54 = vrot.lane.b32.xlu0 %v53, 1
    %v55 = vpop.permute.xlu0 %54
    %v56 = vrot.slane %v55, 4
    %vm57 = vcmask 7168
    %v58 = vsel %vm57, %v56, %v55
    %v61 = vmul.f32 %v37, %v58
    %v62 = vmul.f32 %v38, %v56
    %65 = vst [vmem:[#allocation1] ss:$2 sm:$0xff] %v61
    %s66 = scalar_lea.vmem [#allocation1], 16
    %67 = vst [vmem:[%s66] ss:$2 sm:$0xff] %v62
    %v68 = vld.sshfl [vmem:[#allocation1] sm:$0xff pattern:$0x75316420]
    %v69 = vld.sshfl [vmem:[#allocation1 + $0x8] sm:$0xff pattern:$0x75316420]
    %v70 = vld.sshfl [vmem:[#allocation1 + $0x10] sm:$0xff pattern:$0x75316420]
    %v71 = vrot.slane %v68, 5
    %v72 = vrot.slane %v69, 5
    %v73 = vrot.slane %v70, 5
    %74 = vrot.lane.b32.xlu0 %v71, 127
    %v75 = vpop.permute.xlu0 %74
    %76 = vrot.lane.b32.xlu0 %v72, 127
    %v77 = vpop.permute.xlu0 %76
    %78 = vrot.lane.b32.xlu0 %v73, 127
    %v79 = vpop.permute.xlu0 %78
    %vm80 = vcmask 1039360
    %v81 = vsel %vm80, %v75, %v77
    %v82 = vsel %vm80, %v77, %v79
    %85 = vst [vmem:[#allocation2] sm:$0x38] %v81
    %86 = vst [vmem:[#allocation2 + $0x8] sm:$0x38] %v82
    %v87 = vld [vmem:[%s0] sm:$0x77]
    %v88 = vld [vmem:[%s0 + $0x8] sm:$0x7]
    %v89 = vld [vmem:[%s2] sm:$0xc0]
    %v90 = vld [vmem:[%s2 + $0x8] sm:$0xc0]
    %v91 = vld [vmem:[%s2 + $0x10] sm:$0x1]
    %v92 = vld [vmem:[%s2 + $0x18] sm:$0x1]
    %97 = vst.sshfl [vmem:[#allocation1] sm:$0xff pattern:$0x75316420] %v89
    %98 = vst.sshfl [vmem:[#allocation1 + $0x8] sm:$0xff pattern:$0x75316420] %v90
    %99 = vst.sshfl [vmem:[#allocation1 + $0x10] sm:$0xff pattern:$0x75316420] %v91
    %100 = vst.sshfl [vmem:[#allocation1 + $0x18] sm:$0xff pattern:$0x75316420] %v92
    %s101 = scalar_lea.vmem [#allocation1], 1
    %v102 = vld [vmem:[%s101] ss:$2 sm:$0xff]
    %s103 = scalar_lea.vmem [#allocation1], 16
    %v104 = vld [vmem:[%s103] ss:$2 sm:$0xff]
    %vm105 = vcmask 1041408
    %vm106 = vcmask 1045508
    %vm107 = vmor %vm105, %vm106
    %v108 = vrot.slane %v102, 6
    %v109 = vrot.slane %v108, 4
    %v110 = vrot.slane %v104, 6
    %v111 = vsel %vm107, %v109, %v110
    %112 = vrot.lane.b32.xlu0 %v111, 2
    %v113 = vpop.permute.xlu0 %112
    %v114 = vrot.slane %v113, 4
    %vm115 = vcmask 15360
    %v116 = vsel %vm115, %v114, %v113
    %v119 = vmul.f32 %v87, %v116
    %v120 = vmul.f32 %v88, %v114
    %123 = vst [vmem:[#allocation1] ss:$2 sm:$0xff] %v119
    %s124 = scalar_lea.vmem [#allocation1], 16
    %125 = vst [vmem:[%s124] ss:$2 sm:$0xff] %v120
    %v126 = vld.sshfl [vmem:[#allocation1] sm:$0xff pattern:$0x75316420]
    %v127 = vld.sshfl [vmem:[#allocation1 + $0x8] sm:$0xff pattern:$0x75316420]
    %v128 = vld.sshfl [vmem:[#allocation1 + $0x10] sm:$0xff pattern:$0x75316420]
    %v129 = vrot.slane %v126, 2
    %v130 = vrot.slane %v127, 2
    %v131 = vrot.slane %v128, 2
    %132 = vrot.lane.b32.xlu0 %v129, 126
    %v133 = vpop.permute.xlu0 %132
    %134 = vrot.lane.b32.xlu0 %v130, 126
    %v135 = vpop.permute.xlu0 %134
    %136 = vrot.lane.b32.xlu0 %v131, 126
    %v137 = vpop.permute.xlu0 %136
    %vm138 = vcmask 1031168
    %v139 = vsel %vm138, %v133, %v135
    %v140 = vsel %vm138, %v135, %v137
    %143 = vst [vmem:[#allocation2] sm:$0xc0] %v139
    %144 = vst [vmem:[#allocation2 + $0x8] sm:$0xc0] %v140
    %145 = vst [vmem:[#allocation2 + $0x20] sm:$0x1] %v139
    %146 = vst [vmem:[#allocation2 + $0x28] sm:$0x1] %v140
    %v147 = vld [vmem:[%s0] sm:$0x77]
    %v148 = vld [vmem:[%s0 + $0x8] sm:$0x7]
    %v149 = vld [vmem:[%s2 + $0x10] sm:$0xe]
    %v150 = vld [vmem:[%s2 + $0x18] sm:$0xe]
    %v153 = vrot.slane %v150, 4
    %v154 = vsel %vm25, %v149, %v153
    %v155 = vrot.slane %v154, 5
    %v156 = vrot.slane %v155, 4
    %157 = vrot.lane.b32.xlu0 %v156, 16
    %v158 = vpop.permute.xlu0 %157
    %v159 = vrot.slane %v158, 4
    %vm160 = vcmask 130048
    %v161 = vsel %vm160, %v159, %v158
    %v164 = vmul.f32 %v147, %v161
    %v165 = vmul.f32 %v148, %v159
    %168 = vst [vmem:[#allocation1] ss:$2 sm:$0xff] %v164
    %s169 = scalar_lea.vmem [#allocation1], 16
    %170 = vst [vmem:[%s169] ss:$2 sm:$0xff] %v165
    %v171 = vld.sshfl [vmem:[#allocation1] sm:$0xff pattern:$0x75316420]
    %v172 = vld.sshfl [vmem:[#allocation1 + $0x8] sm:$0xff pattern:$0x75316420]
    %v173 = vld.sshfl [vmem:[#allocation1 + $0x10] sm:$0xff pattern:$0x75316420]
    %v174 = vrot.slane %v171, 7
    %v175 = vrot.slane %v172, 7
    %v176 = vrot.slane %v173, 7
    %177 = vrot.lane.b32.xlu0 %v174, 112
    %v178 = vpop.permute.xlu0 %177
    %179 = vrot.lane.b32.xlu0 %v175, 112
    %v180 = vpop.permute.xlu0 %179
    %181 = vrot.lane.b32.xlu0 %v176, 112
    %v182 = vpop.permute.xlu0 %181
    %vm183 = vcmask 916480
    %v184 = vsel %vm183, %v178, %v180
    %v185 = vsel %vm183, %v180, %v182
    %188 = vst [vmem:[#allocation2 + $0x20] sm:$0xe] %v184
    %189 = vst [vmem:[#allocation2 + $0x28] sm:$0xe] %v185
    %v190 = vld [vmem:[%s0] sm:$0x77]
    %v191 = vld [vmem:[%s0 + $0x8] sm:$0x7]
    %v192 = vld [vmem:[%s2 + $0x10] sm:$0x70]
    %v193 = vld [vmem:[%s2 + $0x18] sm:$0x70]
    %196 = vst.sshfl [vmem:[#allocation1] sm:$0xff pattern:$0x75316420] %v192
    %197 = vst.sshfl [vmem:[#allocation1 + $0x8] sm:$0xff pattern:$0x75316420] %v193
    %s198 = scalar_lea.vmem [#allocation1], 1
    %v199 = vld [vmem:[%s198] ss:$2 sm:$0xff]
    %200 = vrot.lane.b32.xlu0 %v199, 17
    %v201 = vpop.permute.xlu0 %200
    %v202 = vrot.slane %v201, 4
    %vm203 = vcmask 138240
    %v204 = vsel %vm203, %v202, %v201
    %v207 = vmul.f32 %v190, %v204
    %v208 = vmul.f32 %v191, %v202
    %s211 = scalar_lea.vmem [#allocation1], 1
    %212 = vst [vmem:[%s211] ss:$2 sm:$0xff] %v207
    %s213 = scalar_lea.vmem [#allocation1], 17
    %214 = vst [vmem:[%s213] ss:$2 sm:$0xff] %v208
    %v215 = vld.sshfl [vmem:[#allocation1] sm:$0xff pattern:$0x75316420]
    %v216 = vld.sshfl [vmem:[#allocation1 + $0x8] sm:$0xff pattern:$0x75316420]
    %v217 = vld.sshfl [vmem:[#allocation1 + $0x10] sm:$0xff pattern:$0x75316420]
    %218 = vrot.lane.b32.xlu0 %v215, 111
    %v219 = vpop.permute.xlu0 %218
    %220 = vrot.lane.b32.xlu0 %v216, 111
    %v221 = vpop.permute.xlu0 %220
    %222 = vrot.lane.b32.xlu0 %v217, 111
    %v223 = vpop.permute.xlu0 %222
    %vm224 = vcmask 908288
    %v225 = vsel %vm224, %v219, %v221
    %v226 = vsel %vm224, %v221, %v223
    %229 = vst [vmem:[#allocation2 + $0x20] sm:$0x70] %v225
    %230 = vst [vmem:[#allocation2 + $0x28] sm:$0x70] %v226
    %v231 = vld [vmem:[%s0] sm:$0x77]
    %v232 = vld [vmem:[%s0 + $0x8] sm:$0x7]
    %v233 = vld [vmem:[%s2 + $0x10] sm:$0x80]
    %v234 = vld [vmem:[%s2 + $0x18] sm:$0x80]
    %v235 = vld [vmem:[%s2 + $0x20] sm:$0x3]
    %v236 = vld [vmem:[%s2 + $0x28] sm:$0x3]
    %241 = vst.sshfl [vmem:[#allocation1] sm:$0xff pattern:$0x75316420] %v233
    %242 = vst.sshfl [vmem:[#allocation1 + $0x8] sm:$0xff pattern:$0x75316420] %v234
    %243 = vst.sshfl [vmem:[#allocation1 + $0x10] sm:$0xff pattern:$0x75316420] %v235
    %244 = vst.sshfl [vmem:[#allocation1 + $0x18] sm:$0xff pattern:$0x75316420] %v236
    %s245 = scalar_lea.vmem [#allocation1], 1
    %v246 = vld [vmem:[%s245] ss:$2 sm:$0xff]
    %s247 = scalar_lea.vmem [#allocation1], 16
    %v248 = vld [vmem:[%s247] ss:$2 sm:$0xff]
    %v249 = vrot.slane %v246, 7
    %v250 = vrot.slane %v249, 4
    %v251 = vrot.slane %v248, 7
    %v252 = vsel %vm49, %v250, %v251
    %253 = vrot.lane.b32.xlu0 %v252, 18
    %v254 = vpop.permute.xlu0 %253
    %v255 = vrot.slane %v254, 4
    %vm256 = vcmask 146432
    %v257 = vsel %vm256, %v255, %v254
    %v260 = vmul.f32 %v231, %v257
    %v261 = vmul.f32 %v232, %v255
    %264 = vst [vmem:[#allocation1] ss:$2 sm:$0xff] %v260
    %s265 = scalar_lea.vmem [#allocation1], 16
    %266 = vst [vmem:[%s265] ss:$2 sm:$0xff] %v261
    %v267 = vld.sshfl [vmem:[#allocation1] sm:$0xff pattern:$0x75316420]
    %v268 = vld.sshfl [vmem:[#allocation1 + $0x8] sm:$0xff pattern:$0x75316420]
    %v269 = vld.sshfl [vmem:[#allocation1 + $0x10] sm:$0xff pattern:$0x75316420]
    %v270 = vrot.slane %v267, 1
    %v271 = vrot.slane %v268, 1
    %v272 = vrot.slane %v269, 1
    %273 = vrot.lane.b32.xlu0 %v270, 110
    %v274 = vpop.permute.xlu0 %273
    %275 = vrot.lane.b32.xlu0 %v271, 110
    %v276 = vpop.permute.xlu0 %275
    %277 = vrot.lane.b32.xlu0 %v272, 110
    %v278 = vpop.permute.xlu0 %277
    %vm279 = vcmask 900096
    %v280 = vsel %vm279, %v274, %v276
    %v281 = vsel %vm279, %v276, %v278
    %284 = vst [vmem:[#allocation2 + $0x20] sm:$0x80] %v280
    %285 = vst [vmem:[#allocation2 + $0x28] sm:$0x80] %v281
    %286 = vst [vmem:[#allocation2 + $0x40] sm:$0x3] %v280
    %287 = vst [vmem:[#allocation2 + $0x48] sm:$0x3] %v281
    %v288 = vld [vmem:[%s0] sm:$0x77]
    %v289 = vld [vmem:[%s0 + $0x8] sm:$0x7]
    %v290 = vld [vmem:[%s2 + $0x20] sm:$0x1c]
    %v291 = vld [vmem:[%s2 + $0x28] sm:$0x1c]
    %v294 = vrot.slane %v291, 4
    %v295 = vsel %vm25, %v290, %v294
    %v296 = vsel %vm25, %v294, %v290
    %v297 = vrot.slane %v296, 4
    %v298 = vrot.slane %v295, 6
    %v299 = vrot.slane %v298, 4
    %v300 = vrot.slane %v297, 6
    %v301 = vsel %vm107, %v299, %v300
    %302 = vrot.lane.b32.xlu0 %v301, 32
    %v303 = vpop.permute.xlu0 %302
    %v304 = vrot.slane %v303, 4
    %vm305 = vcmask 261120
    %v306 = vsel %vm305, %v304, %v303
    %v309 = vmul.f32 %v288, %v306
    %v310 = vmul.f32 %v289, %v304
    %313 = vst [vmem:[#allocation1] ss:$2 sm:$0xff] %v309
    %s314 = scalar_lea.vmem [#allocation1], 16
    %315 = vst [vmem:[%s314] ss:$2 sm:$0xff] %v310
    %v316 = vld.sshfl [vmem:[#allocation1] sm:$0xff pattern:$0x75316420]
    %v317 = vld.sshfl [vmem:[#allocation1 + $0x8] sm:$0xff pattern:$0x75316420]
    %v318 = vld.sshfl [vmem:[#allocation1 + $0x10] sm:$0xff pattern:$0x75316420]
    %v319 = vrot.slane %v316, 6
    %v320 = vrot.slane %v317, 6
    %v321 = vrot.slane %v318, 6
    %322 = vrot.lane.b32.xlu0 %v319, 96
    %v323 = vpop.permute.xlu0 %322
    %324 = vrot.lane.b32.xlu0 %v320, 96
    %v325 = vpop.permute.xlu0 %324
    %326 = vrot.lane.b32.xlu0 %v321, 96
    %v327 = vpop.permute.xlu0 %326
    %vm328 = vcmask 785408
    %v329 = vsel %vm328, %v323, %v325
    %v330 = vsel %vm328, %v325, %v327
    %333 = vst [vmem:[#allocation2 + $0x40] sm:$0x1c] %v329
    %334 = vst [vmem:[#allocation2 + $0x48] sm:$0x1c] %v330
    %v335 = vld [vmem:[%s0] sm:$0x77]
    %v336 = vld [vmem:[%s0 + $0x8] sm:$0x7]
    %v337 = vld [vmem:[%s2 + $0x20] sm:$0xe0]
    %v338 = vld [vmem:[%s2 + $0x28] sm:$0xe0]
    %341 = vst.sshfl [vmem:[#allocation1] sm:$0xff pattern:$0x75316420] %v337
    %342 = vst.sshfl [vmem:[#allocation1 + $0x8] sm:$0xff pattern:$0x75316420] %v338
    %s343 = scalar_lea.vmem [#allocation1], 1
    %v344 = vld [vmem:[%s343] ss:$2 sm:$0xff]
    %v345 = vrot.slane %v344, 5
    %v346 = vrot.slane %v345, 4
    %347 = vrot.lane.b32.xlu0 %v346, 33
    %v348 = vpop.permute.xlu0 %347
    %v349 = vrot.slane %v348, 4
    %vm350 = vcmask 269312
    %v351 = vsel %vm350, %v349, %v348
    %v354 = vmul.f32 %v335, %v351
    %v355 = vmul.f32 %v336, %v349
    %358 = vst [vmem:[#allocation1] ss:$2 sm:$0xff] %v354
    %s359 = scalar_lea.vmem [#allocation1], 16
    %360 = vst [vmem:[%s359] ss:$2 sm:$0xff] %v355
    %v361 = vld.sshfl [vmem:[#allocation1] sm:$0xff pattern:$0x75316420]
    %v362 = vld.sshfl [vmem:[#allocation1 + $0x8] sm:$0xff pattern:$0x75316420]
    %v363 = vld.sshfl [vmem:[#allocation1 + $0x10] sm:$0xff pattern:$0x75316420]
    %v364 = vrot.slane %v361, 3
    %v365 = vrot.slane %v362, 3
    %v366 = vrot.slane %v363, 3
    %367 = vrot.lane.b32.xlu0 %v364, 95
    %v368 = vpop.permute.xlu0 %367
    %369 = vrot.lane.b32.xlu0 %v365, 95
    %v370 = vpop.permute.xlu0 %369
    %371 = vrot.lane.b32.xlu0 %v366, 95
    %v372 = vpop.permute.xlu0 %371
    %vm373 = vcmask 777216
    %v374 = vsel %vm373, %v368, %v370
    %v375 = vsel %vm373, %v370, %v372
    %378 = vst [vmem:[#allocation2 + $0x40] sm:$0xe0] %v374
    %379 = vst [vmem:[#allocation2 + $0x48] sm:$0xe0] %v375
    %v380 = vld [vmem:[%s0] sm:$0x77]
    %v381 = vld [vmem:[%s0 + $0x8] sm:$0x7]
    %v382 = vld [vmem:[%s2 + $0x30] sm:$0x7]
    %v383 = vld [vmem:[%s2 + $0x38] sm:$0x7]
    %v386 = vrot.slane %v383, 4
    %v387 = vsel %vm25, %v382, %v386
    %388 = vrot.lane.b32.xlu0 %v387, 34
    %v389 = vpop.permute.xlu0 %388
    %v390 = vrot.slane %v389, 4
    %vm391 = vcmask 277504
    %v392 = vsel %vm391, %v390, %v389
    %v395 = vmul.f32 %v380, %v392
    %v396 = vmul.f32 %v381, %v390
    %399 = vst [vmem:[#allocation1] ss:$2 sm:$0xff] %v395
    %s400 = scalar_lea.vmem [#allocation1], 16
    %401 = vst [vmem:[%s400] ss:$2 sm:$0xff] %v396
    %v402 = vld.sshfl [vmem:[#allocation1] sm:$0xff pattern:$0x75316420]
    %v403 = vld.sshfl [vmem:[#allocation1 + $0x8] sm:$0xff pattern:$0x75316420]
    %v404 = vld.sshfl [vmem:[#allocation1 + $0x10] sm:$0xff pattern:$0x75316420]
    %405 = vrot.lane.b32.xlu0 %v402, 94
    %v406 = vpop.permute.xlu0 %405
    %407 = vrot.lane.b32.xlu0 %v403, 94
    %v408 = vpop.permute.xlu0 %407
    %409 = vrot.lane.b32.xlu0 %v404, 94
    %v410 = vpop.permute.xlu0 %409
    %vm411 = vcmask 769024
    %v412 = vsel %vm411, %v406, %v408
    %v413 = vsel %vm411, %v408, %v410
    %416 = vst [vmem:[#allocation2 + $0x60] sm:$0x7] %v412
    %417 = vst [vmem:[#allocation2 + $0x68] sm:$0x7] %v413
    %s418 = scalar_lea.vmem %s0, 12
    %v419 = vld [vmem:[%s418] sm:$0x77]
    %v420 = vld [vmem:[%s2] sm:$0x7]
    %v421 = vld [vmem:[%s2 + $0x8] sm:$0x7]
    %v424 = vrot.slane %v421, 4
    %v425 = vsel %vm25, %v420, %v424
    %v427 = vmul.f32 %v419, %v425
    %429 = vst [vmem:[#allocation1] ss:$2 sm:$0xff] %v427
    %v430 = vld.sshfl [vmem:[#allocation1] sm:$0xff pattern:$0x75316420]
    %v431 = vld.sshfl [vmem:[#allocation1 + $0x8] sm:$0xff pattern:$0x75316420]
    %434 = vst [vmem:[#allocation2 + $0x10] sm:$0x7] %v430
    %435 = vst [vmem:[#allocation2 + $0x18] sm:$0x7] %v431
    %v436 = vld [vmem:[%s418] sm:$0x77]
    %v437 = vld [vmem:[%s418 + $0x8] sm:$0x7]
    %v438 = vld [vmem:[%s2] sm:$0x38]
    %v439 = vld [vmem:[%s2 + $0x8] sm:$0x38]
    %v442 = vrot.slane %v439, 4
    %v443 = vsel %vm25, %v438, %v442
    %v444 = vsel %vm25, %v442, %v438
    %v445 = vrot.slane %v444, 4
    %v446 = vrot.slane %v443, 7
    %v447 = vrot.slane %v446, 4
    %v448 = vrot.slane %v445, 7
    %v449 = vsel %vm49, %v447, %v448
    %450 = vrot.lane.b32.xlu0 %v449, 1
    %v451 = vpop.permute.xlu0 %450
    %v452 = vrot.slane %v451, 4
    %v453 = vsel %vm57, %v452, %v451
    %v456 = vmul.f32 %v436, %v453
    %v457 = vmul.f32 %v437, %v452
    %460 = vst [vmem:[#allocation1] ss:$2 sm:$0xff] %v456
    %s461 = scalar_lea.vmem [#allocation1], 16
    %462 = vst [vmem:[%s461] ss:$2 sm:$0xff] %v457
    %v463 = vld.sshfl [vmem:[#allocation1] sm:$0xff pattern:$0x75316420]
    %v464 = vld.sshfl [vmem:[#allocation1 + $0x8] sm:$0xff pattern:$0x75316420]
    %v465 = vld.sshfl [vmem:[#allocation1 + $0x10] sm:$0xff pattern:$0x75316420]
    %v466 = vrot.slane %v463, 5
    %v467 = vrot.slane %v464, 5
    %v468 = vrot.slane %v465, 5
    %469 = vrot.lane.b32.xlu0 %v466, 127
    %v470 = vpop.permute.xlu0 %469
    %471 = vrot.lane.b32.xlu0 %v467, 127
    %v472 = vpop.permute.xlu0 %471
    %473 = vrot.lane.b32.xlu0 %v468, 127
    %v474 = vpop.permute.xlu0 %473
    %v475 = vsel %vm80, %v470, %v472
    %v476 = vsel %vm80, %v472, %v474
    %479 = vst [vmem:[#allocation2 + $0x10] sm:$0x38] %v475
    %480 = vst [vmem:[#allocation2 + $0x18] sm:$0x38] %v476
    %v481 = vld [vmem:[%s418] sm:$0x77]
    %v482 = vld [vmem:[%s418 + $0x8] sm:$0x7]
    %v483 = vld [vmem:[%s2] sm:$0xc0]
    %v484 = vld [vmem:[%s2 + $0x8] sm:$0xc0]
    %v485 = vld [vmem:[%s2 + $0x10] sm:$0x1]
    %v486 = vld [vmem:[%s2 + $0x18] sm:$0x1]
    %491 = vst.sshfl [vmem:[#allocation1] sm:$0xff pattern:$0x75316420] %v483
    %492 = vst.sshfl [vmem:[#allocation1 + $0x8] sm:$0xff pattern:$0x75316420] %v484
    %493 = vst.sshfl [vmem:[#allocation1 + $0x10] sm:$0xff pattern:$0x75316420] %v485
    %494 = vst.sshfl [vmem:[#allocation1 + $0x18] sm:$0xff pattern:$0x75316420] %v486
    %s495 = scalar_lea.vmem [#allocation1], 1
    %v496 = vld [vmem:[%s495] ss:$2 sm:$0xff]
    %s497 = scalar_lea.vmem [#allocation1], 16
    %v498 = vld [vmem:[%s497] ss:$2 sm:$0xff]
    %v499 = vrot.slane %v496, 6
    %v500 = vrot.slane %v499, 4
    %v501 = vrot.slane %v498, 6
    %v502 = vsel %vm107, %v500, %v501
    %503 = vrot.lane.b32.xlu0 %v502, 2
    %v504 = vpop.permute.xlu0 %503
    %v505 = vrot.slane %v504, 4
    %v506 = vsel %vm115, %v505, %v504
    %v509 = vmul.f32 %v481, %v506
    %v510 = vmul.f32 %v482, %v505
    %513 = vst [vmem:[#allocation1] ss:$2 sm:$0xff] %v509
    %s514 = scalar_lea.vmem [#allocation1], 16
    %515 = vst [vmem:[%s514] ss:$2 sm:$0xff] %v510
    %v516 = vld.sshfl [vmem:[#allocation1] sm:$0xff pattern:$0x75316420]
    %v517 = vld.sshfl [vmem:[#allocation1 + $0x8] sm:$0xff pattern:$0x75316420]
    %v518 = vld.sshfl [vmem:[#allocation1 + $0x10] sm:$0xff pattern:$0x75316420]
    %v519 = vrot.slane %v516, 2
    %v520 = vrot.slane %v517, 2
    %v521 = vrot.slane %v518, 2
    %522 = vrot.lane.b32.xlu0 %v519, 126
    %v523 = vpop.permute.xlu0 %522
    %524 = vrot.lane.b32.xlu0 %v520, 126
    %v525 = vpop.permute.xlu0 %524
    %526 = vrot.lane.b32.xlu0 %v521, 126
    %v527 = vpop.permute.xlu0 %526
    %v528 = vsel %vm138, %v523, %v525
    %v529 = vsel %vm138, %v525, %v527
    %532 = vst [vmem:[#allocation2 + $0x10] sm:$0xc0] %v528
    %533 = vst [vmem:[#allocation2 + $0x18] sm:$0xc0] %v529
    %534 = vst [vmem:[#allocation2 + $0x30] sm:$0x1] %v528
    %535 = vst [vmem:[#allocation2 + $0x38] sm:$0x1] %v529
    %v536 = vld [vmem:[%s418] sm:$0x77]
    %v537 = vld [vmem:[%s418 + $0x8] sm:$0x7]
    %v538 = vld [vmem:[%s2 + $0x10] sm:$0xe]
    %v539 = vld [vmem:[%s2 + $0x18] sm:$0xe]
    %v542 = vrot.slane %v539, 4
    %v543 = vsel %vm25, %v538, %v542
    %v544 = vrot.slane %v543, 5
    %v545 = vrot.slane %v544, 4
    %546 = vrot.lane.b32.xlu0 %v545, 16
    %v547 = vpop.permute.xlu0 %546
    %v548 = vrot.slane %v547, 4
    %v549 = vsel %vm160, %v548, %v547
    %v552 = vmul.f32 %v536, %v549
    %v553 = vmul.f32 %v537, %v548
    %556 = vst [vmem:[#allocation1] ss:$2 sm:$0xff] %v552
    %s557 = scalar_lea.vmem [#allocation1], 16
    %558 = vst [vmem:[%s557] ss:$2 sm:$0xff] %v553
    %v559 = vld.sshfl [vmem:[#allocation1] sm:$0xff pattern:$0x75316420]
    %v560 = vld.sshfl [vmem:[#allocation1 + $0x8] sm:$0xff pattern:$0x75316420]
    %v561 = vld.sshfl [vmem:[#allocation1 + $0x10] sm:$0xff pattern:$0x75316420]
    %v562 = vrot.slane %v559, 7
    %v563 = vrot.slane %v560, 7
    %v564 = vrot.slane %v561, 7
    %565 = vrot.lane.b32.xlu0 %v562, 112
    %v566 = vpop.permute.xlu0 %565
    %567 = vrot.lane.b32.xlu0 %v563, 112
    %v568 = vpop.permute.xlu0 %567
    %569 = vrot.lane.b32.xlu0 %v564, 112
    %v570 = vpop.permute.xlu0 %569
    %v571 = vsel %vm183, %v566, %v568
    %v572 = vsel %vm183, %v568, %v570
    %575 = vst [vmem:[#allocation2 + $0x30] sm:$0xe] %v571
    %576 = vst [vmem:[#allocation2 + $0x38] sm:$0xe] %v572
    %v577 = vld [vmem:[%s418] sm:$0x77]
    %v578 = vld [vmem:[%s418 + $0x8] sm:$0x7]
    %v579 = vld [vmem:[%s2 + $0x10] sm:$0x70]
    %v580 = vld [vmem:[%s2 + $0x18] sm:$0x70]
    %583 = vst.sshfl [vmem:[#allocation1] sm:$0xff pattern:$0x75316420] %v579
    %584 = vst.sshfl [vmem:[#allocation1 + $0x8] sm:$0xff pattern:$0x75316420] %v580
    %s585 = scalar_lea.vmem [#allocation1], 1
    %v586 = vld [vmem:[%s585] ss:$2 sm:$0xff]
    %587 = vrot.lane.b32.xlu0 %v586, 17
    %v588 = vpop.permute.xlu0 %587
    %v589 = vrot.slane %v588, 4
    %v590 = vsel %vm203, %v589, %v588
    %v593 = vmul.f32 %v577, %v590
    %v594 = vmul.f32 %v578, %v589
    %s597 = scalar_lea.vmem [#allocation1], 1
    %598 = vst [vmem:[%s597] ss:$2 sm:$0xff] %v593
    %s599 = scalar_lea.vmem [#allocation1], 17
    %600 = vst [vmem:[%s599] ss:$2 sm:$0xff] %v594
    %v601 = vld.sshfl [vmem:[#allocation1] sm:$0xff pattern:$0x75316420]
    %v602 = vld.sshfl [vmem:[#allocation1 + $0x8] sm:$0xff pattern:$0x75316420]
    %v603 = vld.sshfl [vmem:[#allocation1 + $0x10] sm:$0xff pattern:$0x75316420]
    %604 = vrot.lane.b32.xlu0 %v601, 111
    %v605 = vpop.permute.xlu0 %604
    %606 = vrot.lane.b32.xlu0 %v602, 111
    %v607 = vpop.permute.xlu0 %606
    %608 = vrot.lane.b32.xlu0 %v603, 111
    %v609 = vpop.permute.xlu0 %608
    %v610 = vsel %vm224, %v605, %v607
    %v611 = vsel %vm224, %v607, %v609
    %614 = vst [vmem:[#allocation2 + $0x30] sm:$0x70] %v610
    %615 = vst [vmem:[#allocation2 + $0x38] sm:$0x70] %v611
    %v616 = vld [vmem:[%s418] sm:$0x77]
    %v617 = vld [vmem:[%s418 + $0x8] sm:$0x7]
    %v618 = vld [vmem:[%s2 + $0x10] sm:$0x80]
    %v619 = vld [vmem:[%s2 + $0x18] sm:$0x80]
    %v620 = vld [vmem:[%s2 + $0x20] sm:$0x3]
    %v621 = vld [vmem:[%s2 + $0x28] sm:$0x3]
    %626 = vst.sshfl [vmem:[#allocation1] sm:$0xff pattern:$0x75316420] %v618
    %627 = vst.sshfl [vmem:[#allocation1 + $0x8] sm:$0xff pattern:$0x75316420] %v619
    %628 = vst.sshfl [vmem:[#allocation1 + $0x10] sm:$0xff pattern:$0x75316420] %v620
    %629 = vst.sshfl [vmem:[#allocation1 + $0x18] sm:$0xff pattern:$0x75316420] %v621
    %s630 = scalar_lea.vmem [#allocation1], 1
    %v631 = vld [vmem:[%s630] ss:$2 sm:$0xff]
    %s632 = scalar_lea.vmem [#allocation1], 16
    %v633 = vld [vmem:[%s632] ss:$2 sm:$0xff]
    %v634 = vrot.slane %v631, 7
    %v635 = vrot.slane %v634, 4
    %v636 = vrot.slane %v633, 7
    %v637 = vsel %vm49, %v635, %v636
    %638 = vrot.lane.b32.xlu0 %v637, 18
    %v639 = vpop.permute.xlu0 %638
    %v640 = vrot.slane %v639, 4
    %v641 = vsel %vm256, %v640, %v639
    %v644 = vmul.f32 %v616, %v641
    %v645 = vmul.f32 %v617, %v640
    %648 = vst [vmem:[#allocation1] ss:$2 sm:$0xff] %v644
    %s649 = scalar_lea.vmem [#allocation1], 16
    %650 = vst [vmem:[%s649] ss:$2 sm:$0xff] %v645
    %v651 = vld.sshfl [vmem:[#allocation1] sm:$0xff pattern:$0x75316420]
    %v652 = vld.sshfl [vmem:[#allocation1 + $0x8] sm:$0xff pattern:$0x75316420]
    %v653 = vld.sshfl [vmem:[#allocation1 + $0x10] sm:$0xff pattern:$0x75316420]
    %v654 = vrot.slane %v651, 1
    %v655 = vrot.slane %v652, 1
    %v656 = vrot.slane %v653, 1
    %657 = vrot.lane.b32.xlu0 %v654, 110
    %v658 = vpop.permute.xlu0 %657
    %659 = vrot.lane.b32.xlu0 %v655, 110
    %v660 = vpop.permute.xlu0 %659
    %661 = vrot.lane.b32.xlu0 %v656, 110
    %v662 = vpop.permute.xlu0 %661
    %v663 = vsel %vm279, %v658, %v660
    %v664 = vsel %vm279, %v660, %v662
    %667 = vst [vmem:[#allocation2 + $0x30] sm:$0x80] %v663
    %668 = vst [vmem:[#allocation2 + $0x38] sm:$0x80] %v664
    %669 = vst [vmem:[#allocation2 + $0x50] sm:$0x3] %v663
    %670 = vst [vmem:[#allocation2 + $0x58] sm:$0x3] %v664
    %v671 = vld [vmem:[%s418] sm:$0x77]
    %v672 = vld [vmem:[%s418 + $0x8] sm:$0x7]
    %v673 = vld [vmem:[%s2 + $0x20] sm:$0x1c]
    %v674 = vld [vmem:[%s2 + $0x28] sm:$0x1c]
    %v677 = vrot.slane %v674, 4
    %v678 = vsel %vm25, %v673, %v677
    %v679 = vsel %vm25, %v677, %v673
    %v680 = vrot.slane %v679, 4
    %v681 = vrot.slane %v678, 6
    %v682 = vrot.slane %v681, 4
    %v683 = vrot.slane %v680, 6
    %v684 = vsel %vm107, %v682, %v683
    %685 = vrot.lane.b32.xlu0 %v684, 32
    %v686 = vpop.permute.xlu0 %685
    %v687 = vrot.slane %v686, 4
    %v688 = vsel %vm305, %v687, %v686
    %v691 = vmul.f32 %v671, %v688
    %v692 = vmul.f32 %v672, %v687
    %695 = vst [vmem:[#allocation1] ss:$2 sm:$0xff] %v691
    %s696 = scalar_lea.vmem [#allocation1], 16
    %697 = vst [vmem:[%s696] ss:$2 sm:$0xff] %v692
    %v698 = vld.sshfl [vmem:[#allocation1] sm:$0xff pattern:$0x75316420]
    %v699 = vld.sshfl [vmem:[#allocation1 + $0x8] sm:$0xff pattern:$0x75316420]
    %v700 = vld.sshfl [vmem:[#allocation1 + $0x10] sm:$0xff pattern:$0x75316420]
    %v701 = vrot.slane %v698, 6
    %v702 = vrot.slane %v699, 6
    %v703 = vrot.slane %v700, 6
    %704 = vrot.lane.b32.xlu0 %v701, 96
    %v705 = vpop.permute.xlu0 %704
    %706 = vrot.lane.b32.xlu0 %v702, 96
    %v707 = vpop.permute.xlu0 %706
    %708 = vrot.lane.b32.xlu0 %v703, 96
    %v709 = vpop.permute.xlu0 %708
    %v710 = vsel %vm328, %v705, %v707
    %v711 = vsel %vm328, %v707, %v709
    %714 = vst [vmem:[#allocation2 + $0x50] sm:$0x1c] %v710
    %715 = vst [vmem:[#allocation2 + $0x58] sm:$0x1c] %v711
    %v716 = vld [vmem:[%s418] sm:$0x77]
    %v717 = vld [vmem:[%s418 + $0x8] sm:$0x7]
    %v718 = vld [vmem:[%s2 + $0x20] sm:$0xe0]
    %v719 = vld [vmem:[%s2 + $0x28] sm:$0xe0]
    %722 = vst.sshfl [vmem:[#allocation1] sm:$0xff pattern:$0x75316420] %v718
    %723 = vst.sshfl [vmem:[#allocation1 + $0x8] sm:$0xff pattern:$0x75316420] %v719
    %s724 = scalar_lea.vmem [#allocation1], 1
    %v725 = vld [vmem:[%s724] ss:$2 sm:$0xff]
    %v726 = vrot.slane %v725, 5
    %v727 = vrot.slane %v726, 4
    %728 = vrot.lane.b32.xlu0 %v727, 33
    %v729 = vpop.permute.xlu0 %728
    %v730 = vrot.slane %v729, 4
    %v731 = vsel %vm350, %v730, %v729
    %v734 = vmul.f32 %v716, %v731
    %v735 = vmul.f32 %v717, %v730
    %738 = vst [vmem:[#allocation1] ss:$2 sm:$0xff] %v734
    %s739 = scalar_lea.vmem [#allocation1], 16
    %740 = vst [vmem:[%s739] ss:$2 sm:$0xff] %v735
    %v741 = vld.sshfl [vmem:[#allocation1] sm:$0xff pattern:$0x75316420]
    %v742 = vld.sshfl [vmem:[#allocation1 + $0x8] sm:$0xff pattern:$0x75316420]
    %v743 = vld.sshfl [vmem:[#allocation1 + $0x10] sm:$0xff pattern:$0x75316420]
    %v744 = vrot.slane %v741, 3
    %v745 = vrot.slane %v742, 3
    %v746 = vrot.slane %v743, 3
    %747 = vrot.lane.b32.xlu0 %v744, 95
    %v748 = vpop.permute.xlu0 %747
    %749 = vrot.lane.b32.xlu0 %v745, 95
    %v750 = vpop.permute.xlu0 %749
    %751 = vrot.lane.b32.xlu0 %v746, 95
    %v752 = vpop.permute.xlu0 %751
    %v753 = vsel %vm373, %v748, %v750
    %v754 = vsel %vm373, %v750, %v752
    %757 = vst [vmem:[#allocation2 + $0x50] sm:$0xe0] %v753
    %758 = vst [vmem:[#allocation2 + $0x58] sm:$0xe0] %v754
    %v759 = vld [vmem:[%s418] sm:$0x77]
    %v760 = vld [vmem:[%s418 + $0x8] sm:$0x7]
    %v761 = vld [vmem:[%s2 + $0x30] sm:$0x7]
    %v762 = vld [vmem:[%s2 + $0x38] sm:$0x7]
    %v765 = vrot.slane %v762, 4
    %v766 = vsel %vm25, %v761, %v765
    %767 = vrot.lane.b32.xlu0 %v766, 34
    %v768 = vpop.permute.xlu0 %767
    %v769 = vrot.slane %v768, 4
    %v770 = vsel %vm391, %v769, %v768
    %v773 = vmul.f32 %v759, %v770
    %v774 = vmul.f32 %v760, %v769
    %777 = vst [vmem:[#allocation1] ss:$2 sm:$0xff] %v773
    %s778 = scalar_lea.vmem [#allocation1], 16
    %779 = vst [vmem:[%s778] ss:$2 sm:$0xff] %v774
    %v780 = vld.sshfl [vmem:[#allocation1] sm:$0xff pattern:$0x75316420]
    %v781 = vld.sshfl [vmem:[#allocation1 + $0x8] sm:$0xff pattern:$0x75316420]
    %v782 = vld.sshfl [vmem:[#allocation1 + $0x10] sm:$0xff pattern:$0x75316420]
    %783 = vrot.lane.b32.xlu0 %v780, 94
    %v784 = vpop.permute.xlu0 %783
    %785 = vrot.lane.b32.xlu0 %v781, 94
    %v786 = vpop.permute.xlu0 %785
    %787 = vrot.lane.b32.xlu0 %v782, 94
    %v788 = vpop.permute.xlu0 %787
    %v789 = vsel %vm411, %v784, %v786
    %v790 = vsel %vm411, %v786, %v788
    %793 = vst [vmem:[#allocation2 + $0x70] sm:$0x7] %v789
    %794 = vst [vmem:[#allocation2 + $0x78] sm:$0x7] %v790
    %v795 = vld [vmem:[%s1] sm:$0xff]
    %v796 = vld [vmem:[%s1 + $0x8] sm:$0xff]
    %v797 = vld [vmem:[%s1 + $0x10] sm:$0xff]
    %v798 = vld [vmem:[%s1 + $0x18] sm:$0xff]
    %v799 = vld [vmem:[%s1 + $0x20] sm:$0xff]
    %v800 = vld [vmem:[%s1 + $0x28] sm:$0xff]
    %v801 = vld [vmem:[#allocation2] sm:$0xff]
    %v802 = vld [vmem:[#allocation2 + $0x8] sm:$0xff]
    %v803 = vld [vmem:[#allocation2 + $0x10] sm:$0xff]
    %v804 = vld [vmem:[#allocation2 + $0x18] sm:$0xff]
    %v805 = vld [vmem:[#allocation2 + $0x20] sm:$0xff]
    %v806 = vld [vmem:[#allocation2 + $0x28] sm:$0xff]
    %v807 = vld [vmem:[#allocation2 + $0x30] sm:$0xff]
    %v808 = vld [vmem:[#allocation2 + $0x38] sm:$0xff]
    %v809 = vld [vmem:[#allocation2 + $0x40] sm:$0xff]
    %v810 = vld [vmem:[#allocation2 + $0x48] sm:$0xff]
    %v811 = vld [vmem:[#allocation2 + $0x50] sm:$0xff]
    %v812 = vld [vmem:[#allocation2 + $0x58] sm:$0xff]
    %v813 = vld [vmem:[#allocation2 + $0x60] sm:$0xff]
    %v814 = vld [vmem:[#allocation2 + $0x68] sm:$0xff]
    %v815 = vld [vmem:[#allocation2 + $0x70] sm:$0xff]
    %v816 = vld [vmem:[#allocation2 + $0x78] sm:$0xff]
    %v818 = vsel %vm305, %v795, 0
    %v821 = vsel %vm305, %v796, 0
    %v824 = vsel %vm305, %v797, 0
    %v827 = vsel %vm305, %v798, 0
    %v830 = vsel %vm305, %v799, 0
    %v833 = vsel %vm305, %v800, 0
    %835 = vmatpush.msra.mxu0 0.0
    %836 = vmatpush.msra.mxu0 0.0
    %837 = vmatpush.msra.mxu0 0.0
    %838 = vmatpush.msra.mxu0 0.0
    %839 = vmatpush.msra.mxu0 0.0
    %840 = vmatpush.msra.mxu0 0.0
    %841 = vmatpush.msra.mxu0 0.0
    %842 = vmatpush.msra.mxu0 0.0
    %843 = vmatpush.msra.mxu0 0.0
    %844 = vmatpush.msra.mxu0 0.0
    %845 = vmatpush.msra.mxu0 0.0
    %846 = vmatpush.msra.mxu0 0.0
    %847 = vmatpush.msra.mxu0 %v813
    %848 = vmatpush.msra.mxu0 %v809
    %849 = vmatpush.msra.mxu0 %v805
    %850 = vmatpush.msra.mxu0 %v801
    %851 = vmatmul.f32.gmra.mxu0 %v818
    %v852 = vpop.f32.mrf.mxu0
    %v853 = vadd.f32 0.0, %v852
    %854 = vmatmul.f32.gmra.mxu0 %v821
    %v855 = vpop.f32.mrf.mxu0
    %v856 = vadd.f32 0.0, %v855
    %857 = vmatmul.f32.gmra.mxu0 %v824
    %v858 = vpop.f32.mrf.mxu0
    %v859 = vadd.f32 0.0, %v858
    %860 = vmatmul.f32.gmra.mxu0 %v827
    %v861 = vpop.f32.mrf.mxu0
    %v862 = vadd.f32 0.0, %v861
    %863 = vmatmul.f32.gmra.mxu0 %v830
    %v864 = vpop.f32.mrf.mxu0
    %v865 = vadd.f32 0.0, %v864
    %866 = vmatmul.f32.gmra.mxu0 %v833
    %v867 = vpop.f32.mrf.mxu0
    %v868 = vadd.f32 0.0, %v867
    %869 = vdwg.mxu0
    %870 = vmatpush.msra.mxu0 0.0
    %871 = vmatpush.msra.mxu0 0.0
    %872 = vmatpush.msra.mxu0 0.0
    %873 = vmatpush.msra.mxu0 0.0
    %874 = vmatpush.msra.mxu0 0.0
    %875 = vmatpush.msra.mxu0 0.0
    %876 = vmatpush.msra.mxu0 0.0
    %877 = vmatpush.msra.mxu0 0.0
    %878 = vmatpush.msra.mxu0 0.0
    %879 = vmatpush.msra.mxu0 0.0
    %880 = vmatpush.msra.mxu0 0.0
    %881 = vmatpush.msra.mxu0 0.0
    %882 = vmatpush.msra.mxu0 %v814
    %883 = vmatpush.msra.mxu0 %v810
    %884 = vmatpush.msra.mxu0 %v806
    %885 = vmatpush.msra.mxu0 %v802
    %886 = vmatmul.f32.gmra.mxu0 %v818
    %v887 = vpop.f32.mrf.mxu0
    %v888 = vadd.f32 0.0, %v887
    %889 = vmatmul.f32.gmra.mxu0 %v821
    %v890 = vpop.f32.mrf.mxu0
    %v891 = vadd.f32 0.0, %v890
    %892 = vmatmul.f32.gmra.mxu0 %v824
    %v893 = vpop.f32.mrf.mxu0
    %v894 = vadd.f32 0.0, %v893
    %895 = vmatmul.f32.gmra.mxu0 %v827
    %v896 = vpop.f32.mrf.mxu0
    %v897 = vadd.f32 0.0, %v896
    %898 = vmatmul.f32.gmra.mxu0 %v830
    %v899 = vpop.f32.mrf.mxu0
    %v900 = vadd.f32 0.0, %v899
    %901 = vmatmul.f32.gmra.mxu0 %v833
    %v902 = vpop.f32.mrf.mxu0
    %v903 = vadd.f32 0.0, %v902
    %904 = vdwg.mxu0
    %905 = vmatpush.msra.mxu0 0.0
    %906 = vmatpush.msra.mxu0 0.0
    %907 = vmatpush.msra.mxu0 0.0
    %908 = vmatpush.msra.mxu0 0.0
    %909 = vmatpush.msra.mxu0 0.0
    %910 = vmatpush.msra.mxu0 0.0
    %911 = vmatpush.msra.mxu0 0.0
    %912 = vmatpush.msra.mxu0 0.0
    %913 = vmatpush.msra.mxu0 0.0
    %914 = vmatpush.msra.mxu0 0.0
    %915 = vmatpush.msra.mxu0 0.0
    %916 = vmatpush.msra.mxu0 0.0
    %917 = vmatpush.msra.mxu0 %v815
    %918 = vmatpush.msra.mxu0 %v811
    %919 = vmatpush.msra.mxu0 %v807
    %920 = vmatpush.msra.mxu0 %v803
    %921 = vmatmul.f32.gmra.mxu0 %v818
    %v922 = vpop.f32.mrf.mxu0
    %v923 = vadd.f32 0.0, %v922
    %924 = vmatmul.f32.gmra.mxu0 %v821
    %v925 = vpop.f32.mrf.mxu0
    %v926 = vadd.f32 0.0, %v925
    %927 = vmatmul.f32.gmra.mxu0 %v824
    %v928 = vpop.f32.mrf.mxu0
    %v929 = vadd.f32 0.0, %v928
    %930 = vmatmul.f32.gmra.mxu0 %v827
    %v931 = vpop.f32.mrf.mxu0
    %v932 = vadd.f32 0.0, %v931
    %933 = vmatmul.f32.gmra.mxu0 %v830
    %v934 = vpop.f32.mrf.mxu0
    %v935 = vadd.f32 0.0, %v934
    %936 = vmatmul.f32.gmra.mxu0 %v833
    %v937 = vpop.f32.mrf.mxu0
    %v938 = vadd.f32 0.0, %v937
    %939 = vdwg.mxu0
    %940 = vmatpush.msra.mxu0 0.0
    %941 = vmatpush.msra.mxu0 0.0
    %942 = vmatpush.msra.mxu0 0.0
    %943 = vmatpush.msra.mxu0 0.0
    %944 = vmatpush.msra.mxu0 0.0
    %945 = vmatpush.msra.mxu0 0.0
    %946 = vmatpush.msra.mxu0 0.0
    %947 = vmatpush.msra.mxu0 0.0
    %948 = vmatpush.msra.mxu0 0.0
    %949 = vmatpush.msra.mxu0 0.0
    %950 = vmatpush.msra.mxu0 0.0
    %951 = vmatpush.msra.mxu0 0.0
    %952 = vmatpush.msra.mxu0 %v816
    %953 = vmatpush.msra.mxu0 %v812
    %954 = vmatpush.msra.mxu0 %v808
    %955 = vmatpush.msra.mxu0 %v804
    %956 = vmatmul.f32.gmra.mxu0 %v818
    %v957 = vpop.f32.mrf.mxu0
    %v958 = vadd.f32 0.0, %v957
    %959 = vmatmul.f32.gmra.mxu0 %v821
    %v960 = vpop.f32.mrf.mxu0
    %v961 = vadd.f32 0.0, %v960
    %962 = vmatmul.f32.gmra.mxu0 %v824
    %v963 = vpop.f32.mrf.mxu0
    %v964 = vadd.f32 0.0, %v963
    %965 = vmatmul.f32.gmra.mxu0 %v827
    %v966 = vpop.f32.mrf.mxu0
    %v967 = vadd.f32 0.0, %v966
    %968 = vmatmul.f32.gmra.mxu0 %v830
    %v969 = vpop.f32.mrf.mxu0
    %v970 = vadd.f32 0.0, %v969
    %971 = vmatmul.f32.gmra.mxu0 %v833
    %v972 = vpop.f32.mrf.mxu0
    %v973 = vadd.f32 0.0, %v972
    %974 = vdwg.mxu0
    %975 = vst [vmem:[#allocation3] sm:$0xff] %v853
    %976 = vst [vmem:[#allocation3 + $0x8] sm:$0xff] %v888
    %977 = vst [vmem:[#allocation3 + $0x10] sm:$0xff] %v856
    %978 = vst [vmem:[#allocation3 + $0x18] sm:$0xff] %v891
    %979 = vst [vmem:[#allocation3 + $0x20] sm:$0xff] %v859
    %980 = vst [vmem:[#allocation3 + $0x28] sm:$0xff] %v894
    %981 = vst [vmem:[#allocation3 + $0x30] sm:$0xff] %v862
    %982 = vst [vmem:[#allocation3 + $0x38] sm:$0xff] %v897
    %983 = vst [vmem:[#allocation3 + $0x40] sm:$0xff] %v865
    %984 = vst [vmem:[#allocation3 + $0x48] sm:$0xff] %v900
    %985 = vst [vmem:[#allocation3 + $0x50] sm:$0xff] %v868
    %986 = vst [vmem:[#allocation3 + $0x58] sm:$0xff] %v903
    %s987 = scalar_lea.vmem [#allocation3], 96
    %988 = vst [vmem:[%s987] sm:$0xff] %v923
    %989 = vst [vmem:[%s987 + $0x8] sm:$0xff] %v958
    %990 = vst [vmem:[%s987 + $0x10] sm:$0xff] %v926
    %991 = vst [vmem:[%s987 + $0x18] sm:$0xff] %v961
    %992 = vst [vmem:[%s987 + $0x20] sm:$0xff] %v929
    %993 = vst [vmem:[%s987 + $0x28] sm:$0xff] %v964
    %994 = vst [vmem:[%s987 + $0x30] sm:$0xff] %v932
    %995 = vst [vmem:[%s987 + $0x38] sm:$0xff] %v967
    %996 = vst [vmem:[%s987 + $0x40] sm:$0xff] %v935
    %997 = vst [vmem:[%s987 + $0x48] sm:$0xff] %v970
    %998 = vst [vmem:[%s987 + $0x50] sm:$0xff] %v938
    %999 = vst [vmem:[%s987 + $0x58] sm:$0xff] %v973
    // Predicated region
    $region14: #{tpu_custom_call.1} parent=1 // pred_check
      _
    $region15: #{tpu_custom_call.1} parent=1 // pred_check_branch
      %1001 = sbr.rel (0) target = $region17
    $region16: #{tpu_custom_call.1} parent=1 // pred_region
      %1003 = vsyncadd [#allocation4], 0
      %s1004 = sshll.u32 [#allocation3], 4
      %s1005 = int_to_ptr.vmem [resolvable:$true] %s1004
      %s1006 = sshll.u32 %s3, 4
      %s1007 = int_to_ptr.hbm [resolvable:$true] %s1006
      %1012 = dma.vmem_to_hbm [thread:$0]  %s1005, 3072, %s1007, [#allocation4], 256, 256, 16
    $region17: #{tpu_custom_call.1} parent=1 // pred_fallthru
      _
    // Predicated region
    $region18: #{tpu_custom_call.1} parent=1 // pred_check
      _
    $region19: #{tpu_custom_call.1} parent=1 // pred_check_branch
      %1014 = sbr.rel (0) target = $region21
    $region20: #{tpu_custom_call.1} parent=1 // pred_region
      %1016 = dma.done [#allocation4], 3072
    $region21: #{tpu_custom_call.1} parent=1 // pred_fallthru
      _
    %1017 = vsyncpa [#allocation4], 1

</llo_original>
